<compile_context>
chip_gen: v7x
topology: tpu7x:2x2x1
jax: 0.10.0
libtpu: 0.0.40
codegen_flags: <defaults>
</compile_context>

<pallas_src>
import jax
import jax.numpy as jnp
from jax.experimental import pallas as pl
from jax.experimental.pallas import tpu as pltpu


def _round_up(v, m):
    return (v + m - 1) // m * m


def _fit_chunk(total, tk):
    """Largest multiple of 128 that is <= tk and divides total (total % 128 == 0)."""
    tk = min(max(tk, 128), total)
    tk = (tk // 128) * 128
    while total % tk != 0:
        tk -= 128
    return tk


def _maybe_single_buffered_spec(block_shape, index_map):
    """Constant-index spec, single-buffered when the API supports it."""
    buffered = getattr(pl, "Buffered", None)
    if buffered is not None:
        try:
            return pl.BlockSpec(block_shape, index_map, pipeline_mode=buffered(1))
        except TypeError:
            pass
    return pl.BlockSpec(block_shape, index_map)


# ---------------------------------------------------------------------------
# Kernels
# ---------------------------------------------------------------------------
def _layernorm_tail(z, d_model_real, d_model_pad, eps, g, bt, out_dtype):
    inv_d = 1.0 / float(d_model_real)
    mean = jnp.sum(z, axis=-1, keepdims=True) * inv_d      # padded lanes of z are 0
    zc = z - mean
    if d_model_pad != d_model_real:
        lane = jax.lax.broadcasted_iota(jnp.int32, zc.shape, 1)
        zc = jnp.where(lane < d_model_real, zc, 0.0)        # mask padded lanes
    var = jnp.sum(zc * zc, axis=-1, keepdims=True) * inv_d
    zn = zc * jax.lax.rsqrt(var + eps)
    return (zn * g + bt).astype(out_dtype)


def _make_resident_kernel(d_model_real, d_model_pad, eps, mm_dtype):
    """Whole d_ff in one shot: grid = (row_tiles,), weights VMEM-resident."""

    def kernel(x_ref, w1_ref, b1_ref, w2_ref, b2_ref, g_ref, bt_ref, o_ref):
        x_mm = x_ref[...].astype(mm_dtype)
        h = jnp.dot(x_mm, w1_ref[...], preferred_element_type=jnp.float32)
        h = jnp.maximum(h + b1_ref[...], 0.0)
        y = jnp.dot(h.astype(mm_dtype), w2_ref[...],
                    preferred_element_type=jnp.float32)
        z = x_ref[...].astype(jnp.float32) + y + b2_ref[...]
        o_ref[...] = _layernorm_tail(z, d_model_real, d_model_pad, eps,
                                     g_ref[...], bt_ref[...], o_ref.dtype)

    return kernel


def _make_streaming_kernel(d_model_real, d_model_pad, eps, mm_dtype, cache_cast):
    """d_ff chunked as an 'arbitrary' reduction axis with a resident f32 accumulator."""

    def kernel(x_ref, w1_ref, b1_ref, w2_ref, b2_ref, g_ref, bt_ref,
               o_ref, acc_ref, *scratch):
        xcast_ref = scratch[0] if cache_cast else None
        k = pl.program_id(1)

        @pl.when(k == 0)
        def _init():
            # Fold residual + linear_2 bias into the accumulator init, and
            # hoist the matmul-dtype cast of x (reused for every k step).
            acc_ref[...] = x_ref[...].astype(jnp.float32) + b2_ref[...]
            if cache_cast:
                xcast_ref[...] = x_ref[...].astype(mm_dtype)

        x_mm = xcast_ref[...] if cache_cast else x_ref[...]
        h = jnp.dot(x_mm, w1_ref[...], preferred_element_type=jnp.float32)
        h = jnp.maximum(h + b1_ref[...], 0.0)
        acc_ref[...] += jnp.dot(h.astype(mm_dtype), w2_ref[...],
                                preferred_element_type=jnp.float32)

        @pl.when(k == pl.num_programs(1) - 1)
        def _finalize():
            o_ref[...] = _layernorm_tail(acc_ref[...], d_model_real, d_model_pad,
                                         eps, g_ref[...], bt_ref[...], o_ref.dtype)

    return kernel


# ---------------------------------------------------------------------------
# Parameter preparation (one-time: pad + cast, hoisted out of the hot path)
# ---------------------------------------------------------------------------
def prepare_ff_resblock_params(w1, b1, w2, b2, gamma, beta, *, use_bf16=True):
    d_model, d_ff = w1.shape
    d_model_p = _round_up(d_model, 128)
    d_ff_p = _round_up(d_ff, 128)
    mm_dtype = jnp.bfloat16 if use_bf16 else jnp.float32

    w1p = jnp.pad(w1, ((0, d_model_p - d_model), (0, d_ff_p - d_ff))).astype(mm_dtype)
    w2p = jnp.pad(w2, ((0, d_ff_p - d_ff), (0, d_model_p - d_model))).astype(mm_dtype)
    b1p = jnp.pad(b1, (0, d_ff_p - d_ff)).reshape(1, d_ff_p).astype(jnp.float32)
    b2p = jnp.pad(b2, (0, d_model_p - d_model)).reshape(1, d_model_p).astype(jnp.float32)
    gp = jnp.pad(gamma, (0, d_model_p - d_model)).reshape(1, d_model_p).astype(jnp.float32)
    btp = jnp.pad(beta, (0, d_model_p - d_model)).reshape(1, d_model_p).astype(jnp.float32)

    return dict(w1=w1p, b1=b1p, w2=w2p, b2=b2p, gamma=gp, beta=btp,
                d_model=d_model, d_ff=d_ff,
                d_model_p=d_model_p, d_ff_p=d_ff_p, mm_dtype=mm_dtype)


# ---------------------------------------------------------------------------
# Main entry point
# ---------------------------------------------------------------------------
def ff_resblock_prepped(x, params, *, eps=1e-5):
    """x: (..., d_model). params: output of prepare_ff_resblock_params."""
    orig_shape = x.shape
    d_model = params["d_model"]
    d_model_p = params["d_model_p"]
    d_ff_p = params["d_ff_p"]
    mm_dtype = params["mm_dtype"]
    assert orig_shape[-1] == d_model

    x2d = x.reshape(-1, d_model)
    n = x2d.shape[0]

    itm_x = x2d.dtype.itemsize
    itm_o = itm_x                                    # output dtype == input dtype
    itm_w = jnp.dtype(mm_dtype).itemsize
    row_mult = 8 if itm_x >= 4 else 16
    cache_cast = x2d.dtype != jnp.dtype(mm_dtype)

    # --- per-generation VMEM budget -----------------------------------------
    try:
        vmem_cap = int(pltpu.get_tpu_info().vmem_capacity_bytes)
    except Exception:
        vmem_cap = 64 * 1024 * 1024                  # conservative (v7x-sized)
    budget = max(vmem_cap - 8 * 1024 * 1024, 16 * 1024 * 1024)
    big_vmem = vmem_cap >= 100 * 1024 * 1024          # v5e/v6e (128 MiB) vs v7x (64 MiB)
    wbuf = 1 if hasattr(pl, "Buffered") else 2        # resident weights buffer count

    # --- VMEM estimates ------------------------------------------------------
    def est_resident(tm):
        return (2 * tm * d_model_p * itm_x           # x tile (double-buffered)
                + 2 * tm * d_model_p * itm_o         # out tile (double-buffered)
                + wbuf * d_model_p * d_ff_p * itm_w  # W1 resident
                + wbuf * d_ff_p * d_model_p * itm_w  # W2 resident
                + 2 * (d_ff_p + 3 * d_model_p) * 4   # b1/b2/gamma/beta
                + tm * d_ff_p * 4                    # live ReLU intermediate (f32)
                + 2 * tm * d_model_p * 4)            # live z / temporaries

    def est_stream(tm, tk):
        return (2 * tm * d_model_p * itm_x
                + 2 * tm * d_model_p * itm_o
                + 2 * d_model_p * tk * itm_w         # W1 chunk (double-buffered)
                + 2 * tk * d_model_p * itm_w         # W2 chunk (double-buffered)
                + 2 * (tk + 3 * d_model_p) * 4
                + tm * d_model_p * 4                 # f32 accumulator scratch
                + (tm * d_model_p * itm_w if cache_cast else 0)   # cached x cast
                + 2 * tm * tk * 4)                   # live h intermediate

    # --- row tile: clamp to data, guarantee >= 2 tiles for v7x megacore ------
    def clamp_tm(target):
        t = min(target, _round_up(max(n, 1), row_mult))
        if n > row_mult:                              # split rows across 2 TCs
            t = min(t, _round_up(-(-n // 2), row_mult))
        return max(_round_up(t, row_mult), row_mult)

    # --- mode selection: resident weights first, then streaming --------------
    resident_tm = None
    tm_try = clamp_tm(512)
    while True:
        if est_resident(tm_try) <= budget:
            resident_tm = tm_try
            break
        nxt = max(_round_up(tm_try // 2, row_mult), row_mult)
        if nxt == tm_try or tm_try <= max(128, row_mult):
            break
        tm_try = nxt

    if resident_tm is not None:
        mode = "resident"
        tm_eff = resident_tm
        tk_eff = d_ff_p
        est_final = est_resident(tm_eff)
    else:
        mode = "stream"
        tm_eff = clamp_tm(1024 if big_vmem else 384)
        tk_eff = _fit_chunk(d_ff_p, 512 if big_vmem else 256)
        while est_stream(tm_eff, tk_eff) > budget:    # auto-shrink: tk first, then tm
            if tk_eff > 128:
                tk_eff = _fit_chunk(d_ff_p, tk_eff // 2)
            elif tm_eff > row_mult:
                tm_eff = max(_round_up(tm_eff // 2, row_mult), row_mult)
            else:
                break
        est_final = est_stream(tm_eff, tk_eff)

    n_p = _round_up(n, tm_eff)

    # --- x padding (skipped when already aligned) ----------------------------
    if n_p == n and d_model_p == d_model:
        xp = x2d
    else:
        xp = jnp.pad(x2d, ((0, n_p - n), (0, d_model_p - d_model)))

    w1p, b1p, w2p, b2p, gp, btp = (params["w1"], params["b1"], params["w2"],
                                   params["b2"], params["gamma"], params["beta"])

    vmem_limit = int(min(vmem_cap, max(est_final + (8 << 20), 32 << 20)))

    # --- grid / specs ---------------------------------------------------------
    if mode == "resident":
        kernel = _make_resident_kernel(d_model, d_model_p, eps, mm_dtype)
        grid = (n_p // tm_eff,)
        in_specs = [
            pl.BlockSpec((tm_eff, d_model_p), lambda i: (i, 0)),            # x rows
            _maybe_single_buffered_spec((d_model_p, d_ff_p), lambda i: (0, 0)),  # W1
            pl.BlockSpec((1, d_ff_p), lambda i: (0, 0)),                    # b1
            _maybe_single_buffered_spec((d_ff_p, d_model_p), lambda i: (0, 0)),  # W2
            pl.BlockSpec((1, d_model_p), lambda i: (0, 0)),                 # b2
            pl.BlockSpec((1, d_model_p), lambda i: (0, 0)),                 # gamma
            pl.BlockSpec((1, d_model_p), lambda i: (0, 0)),                 # beta
        ]
        out_specs = pl.BlockSpec((tm_eff, d_model_p), lambda i: (i, 0))
        scratch_shapes = []
        dims_sem = ("parallel",)
        weight_streams = 1
    else:
        kernel = _make_streaming_kernel(d_model, d_model_p, eps, mm_dtype, cache_cast)
        grid = (n_p // tm_eff, d_ff_p // tk_eff)
        in_specs = [
            pl.BlockSpec((tm_eff, d_model_p), lambda i, k: (i, 0)),         # x rows
            pl.BlockSpec((d_model_p, tk_eff), lambda i, k: (0, k)),         # W1 chunk
            pl.BlockSpec((1, tk_eff), lambda i, k: (0, k)),                 # b1 chunk
            pl.BlockSpec((tk_eff, d_model_p), lambda i, k: (k, 0)),         # W2 chunk
            pl.BlockSpec((1, d_model_p), lambda i, k: (0, 0)),              # b2
            pl.BlockSpec((1, d_model_p), lambda i, k: (0, 0)),              # gamma
            pl.BlockSpec((1, d_model_p), lambda i, k: (0, 0)),              # beta
        ]
        out_specs = pl.BlockSpec((tm_eff, d_model_p), lambda i, k: (i, 0))
        scratch_shapes = [pltpu.VMEM((tm_eff, d_model_p), jnp.float32)]
        if cache_cast:
            scratch_shapes.append(pltpu.VMEM((tm_eff, d_model_p), mm_dtype))
        dims_sem = ("parallel", "arbitrary")
        weight_streams = grid[0]

    # --- cost estimate (consistent with the chosen streaming strategy) -------
    w_bytes = (w1p.size + w2p.size) * itm_w
    small_bytes = (b1p.size + b2p.size + gp.size + btp.size) * 4
    bytes_accessed = (n_p * d_model_p * itm_x
                      + n_p * d_model_p * itm_o
                      + w_bytes * weight_streams
                      + small_bytes)
    cost = pl.CostEstimate(flops=int(4 * n_p * d_model_p * d_ff_p),
                           transcendentals=int(n_p),
                           bytes_accessed=int(bytes_accessed))

    out = pl.pallas_call(
        kernel,
        out_shape=jax.ShapeDtypeStruct((n_p, d_model_p), x.dtype),
        grid_spec=pltpu.PrefetchScalarGridSpec(
            num_scalar_prefetch=0,
            grid=grid,
            in_specs=in_specs,
            out_specs=out_specs,
            scratch_shapes=scratch_shapes,
        ),
        compiler_params=pltpu.CompilerParams(
            dimension_semantics=dims_sem,
            vmem_limit_bytes=vmem_limit),
        cost_estimate=cost,
    )(xp, w1p, b1p, w2p, b2p, gp, btp)

    return out[:n, :d_model].reshape(orig_shape)


def ff_resblock(x, w1, b1, w2, b2, gamma, beta, *, use_bf16=True, eps=1e-5):
    """Convenience one-shot wrapper (prep + call). Prefer prepping once for reuse."""
    params = prepare_ff_resblock_params(w1, b1, w2, b2, gamma, beta, use_bf16=use_bf16)
    return ff_resblock_prepped(x, params, eps=eps)


# ---------------------------------------------------------------------------
# Reference & test
# ---------------------------------------------------------------------------
def _reference(x, w1, b1, w2, b2, gamma, beta, eps=1e-5):
    xf = x.astype(jnp.float32)
    h = jnp.maximum(xf @ w1 + b1, 0.0)
    y = h @ w2 + b2
    z = xf + y
    mean = jnp.mean(z, axis=-1, keepdims=True)
    var = jnp.mean((z - mean) ** 2, axis=-1, keepdims=True)
    zn = (z - mean) * jax.lax.rsqrt(var + eps)
    return (zn * gamma + beta).astype(x.dtype)


if __name__ == "__main__":
    # Small shapes implied by the forward: x is (batch, seq, d_model)
    batch, seq, d_model, d_ff = 2, 8, 32, 64

    key = jax.random.PRNGKey(0)
    kx, k1, k2, k3, k4 = jax.random.split(key, 5)

    x = jax.random.normal(kx, (batch, seq, d_model), dtype=jnp.float32)

    # Deterministic synthetic parameters (nn.Linear-like scaling).
    w1 = jax.random.normal(k1, (d_model, d_ff), dtype=jnp.float32) / jnp.sqrt(d_model)
    b1 = jax.random.normal(k2, (d_ff,), dtype=jnp.float32) * 0.01
    w2 = jax.random.normal(k3, (d_ff, d_model), dtype=jnp.float32) / jnp.sqrt(d_ff)
    b2 = jax.random.normal(k4, (d_model,), dtype=jnp.float32) * 0.01
    gamma = jnp.ones((d_model,), dtype=jnp.float32)
    beta = jnp.zeros((d_model,), dtype=jnp.float32)

    # One-time parameter prep (pad + bf16 cast hoisted out of the hot path).
    params = prepare_ff_resblock_params(w1, b1, w2, b2, gamma, beta, use_bf16=True)

    out = ff_resblock_prepped(x, params)
    out = jax.block_until_ready(out)

    ref = _reference(x, w1, b1, w2, b2, gamma, beta)
    assert out.shape == x.shape and out.dtype == x.dtype
    # bf16 matmuls with f32 accumulation -> slightly relaxed tolerance.
    assert jnp.allclose(out, ref, atol=5e-2, rtol=5e-2), "mismatch vs reference"

    print("KERNEL_OK")
</pallas_src>

<mosaic_0001>
module attributes {stable_mosaic.version = 11 : i64} {
  func.func @kernel(%arg0: i32, %arg1: memref<8x128xf32, #tpu.memory_space<vmem>>, %arg2: memref<128x128xbf16, #tpu.memory_space<vmem>>, %arg3: memref<1x128xf32, #tpu.memory_space<vmem>>, %arg4: memref<128x128xbf16, #tpu.memory_space<vmem>>, %arg5: memref<1x128xf32, #tpu.memory_space<vmem>>, %arg6: memref<1x128xf32, #tpu.memory_space<vmem>>, %arg7: memref<1x128xf32, #tpu.memory_space<vmem>>, %arg8: memref<8x128xf32, #tpu.memory_space<vmem>>) attributes {dimension_semantics = [#tpu.dimension_semantics<parallel>], iteration_bounds = array<i64: 2>, scalar_prefetch = 0 : i64, scratch_operands = 0 : i64, tpu.core_type = #tpu.core_type<tc>, window_params = [{transform_indices = @transform_0, window_bounds = array<i64: 8, 128>}, {pipeline_mode = #tpu.pipeline_mode<synchronous>, transform_indices = @transform_1, window_bounds = array<i64: 128, 128>}, {pipeline_mode = #tpu.pipeline_mode<synchronous>, transform_indices = @transform_2, window_bounds = array<i64: 1, 128>}, {pipeline_mode = #tpu.pipeline_mode<synchronous>, transform_indices = @transform_3, window_bounds = array<i64: 128, 128>}, {pipeline_mode = #tpu.pipeline_mode<synchronous>, transform_indices = @transform_4, window_bounds = array<i64: 1, 128>}, {pipeline_mode = #tpu.pipeline_mode<synchronous>, transform_indices = @transform_5, window_bounds = array<i64: 1, 128>}, {pipeline_mode = #tpu.pipeline_mode<synchronous>, transform_indices = @transform_6, window_bounds = array<i64: 1, 128>}, {transform_indices = @transform_7, window_bounds = array<i64: 8, 128>}]} {
    %c0 = arith.constant 0 : index
    %c0_0 = arith.constant 0 : index
    %0 = vector.load %arg1[%c0, %c0_0] : memref<8x128xf32, #tpu.memory_space<vmem>>, vector<8x128xf32>
    %1 = arith.truncf %0 : vector<8x128xf32> to vector<8x128xbf16>
    %c0_1 = arith.constant 0 : index
    %c0_2 = arith.constant 0 : index
    %2 = vector.load %arg2[%c0_1, %c0_2] : memref<128x128xbf16, #tpu.memory_space<vmem>>, vector<128x128xbf16>
    %cst = arith.constant dense<0.000000e+00> : vector<8x128xf32>
    %3 = tpu.matmul %1, %2, %cst {dimension_numbers = #tpu.dot_dimension_numbers<[1], [0], [0], [1], [0, 0, 1, 1], [], []>} : vector<8x128xbf16>, vector<128x128xbf16>, vector<8x128xf32> -> vector<8x128xf32>
    %c0_3 = arith.constant 0 : index
    %c0_4 = arith.constant 0 : index
    %4 = vector.load %arg3[%c0_3, %c0_4] : memref<1x128xf32, #tpu.memory_space<vmem>>, vector<1x128xf32>
    %5 = vector.broadcast %4 : vector<1x128xf32> to vector<8x128xf32>
    %6 = arith.addf %3, %5 : vector<8x128xf32>
    %cst_5 = arith.constant 0.000000e+00 : f32
    %7 = vector.broadcast %cst_5 : f32 to vector<8x128xf32>
    %8 = arith.maximumf %6, %7 : vector<8x128xf32>
    %9 = arith.truncf %8 : vector<8x128xf32> to vector<8x128xbf16>
    %c0_6 = arith.constant 0 : index
    %c0_7 = arith.constant 0 : index
    %10 = vector.load %arg4[%c0_6, %c0_7] : memref<128x128xbf16, #tpu.memory_space<vmem>>, vector<128x128xbf16>
    %cst_8 = arith.constant dense<0.000000e+00> : vector<8x128xf32>
    %11 = tpu.matmul %9, %10, %cst_8 {dimension_numbers = #tpu.dot_dimension_numbers<[1], [0], [0], [1], [0, 0, 1, 1], [], []>} : vector<8x128xbf16>, vector<128x128xbf16>, vector<8x128xf32> -> vector<8x128xf32>
    %c0_9 = arith.constant 0 : index
    %c0_10 = arith.constant 0 : index
    %12 = vector.load %arg1[%c0_9, %c0_10] : memref<8x128xf32, #tpu.memory_space<vmem>>, vector<8x128xf32>
    %13 = arith.addf %12, %11 : vector<8x128xf32>
    %c0_11 = arith.constant 0 : index
    %c0_12 = arith.constant 0 : index
    %14 = vector.load %arg5[%c0_11, %c0_12] : memref<1x128xf32, #tpu.memory_space<vmem>>, vector<1x128xf32>
    %15 = vector.broadcast %14 : vector<1x128xf32> to vector<8x128xf32>
    %16 = arith.addf %13, %15 : vector<8x128xf32>
    %c0_13 = arith.constant 0 : index
    %c0_14 = arith.constant 0 : index
    %17 = vector.load %arg6[%c0_13, %c0_14] : memref<1x128xf32, #tpu.memory_space<vmem>>, vector<1x128xf32>
    %c0_15 = arith.constant 0 : index
    %c0_16 = arith.constant 0 : index
    %18 = vector.load %arg7[%c0_15, %c0_16] : memref<1x128xf32, #tpu.memory_space<vmem>>, vector<1x128xf32>
    %cst_17 = arith.constant dense<0.000000e+00> : vector<8xf32>
    %19 = vector.multi_reduction <add>, %16, %cst_17 [1] : vector<8x128xf32> to vector<8xf32>
    %20 = vector.shape_cast %19 : vector<8xf32> to vector<8x1xf32>
    %cst_18 = arith.constant 3.125000e-02 : f32
    %21 = vector.broadcast %cst_18 : f32 to vector<8x1xf32>
    %22 = arith.mulf %20, %21 : vector<8x1xf32>
    %23 = vector.broadcast %22 : vector<8x1xf32> to vector<8x128xf32>
    %24 = arith.subf %16, %23 : vector<8x128xf32>
    %25 = tpu.iota {dimensions = array<i32: 1>} : vector<8x128xi32>
    %c32_i32 = arith.constant 32 : i32
    %26 = vector.broadcast %c32_i32 : i32 to vector<8x128xi32>
    %27 = arith.cmpi slt, %25, %26 : vector<8x128xi32>
    %cst_19 = arith.constant 0.000000e+00 : f32
    %28 = vector.broadcast %cst_19 : f32 to vector<8x128xf32>
    %29 = arith.select %27, %24, %28 : vector<8x128xi1>, vector<8x128xf32>
    %30 = arith.mulf %29, %29 : vector<8x128xf32>
    %cst_20 = arith.constant dense<0.000000e+00> : vector<8xf32>
    %31 = vector.multi_reduction <add>, %30, %cst_20 [1] : vector<8x128xf32> to vector<8xf32>
    %32 = vector.shape_cast %31 : vector<8xf32> to vector<8x1xf32>
    %cst_21 = arith.constant 3.125000e-02 : f32
    %33 = vector.broadcast %cst_21 : f32 to vector<8x1xf32>
    %34 = arith.mulf %32, %33 : vector<8x1xf32>
    %cst_22 = arith.constant 9.99999974E-6 : f32
    %35 = vector.broadcast %cst_22 : f32 to vector<8x1xf32>
    %36 = arith.addf %34, %35 : vector<8x1xf32>
    %37 = math.rsqrt %36 : vector<8x1xf32>
    %38 = vector.broadcast %37 : vector<8x1xf32> to vector<8x128xf32>
    %39 = arith.mulf %29, %38 : vector<8x128xf32>
    %40 = vector.broadcast %17 : vector<1x128xf32> to vector<8x128xf32>
    %41 = arith.mulf %39, %40 : vector<8x128xf32>
    %42 = vector.broadcast %18 : vector<1x128xf32> to vector<8x128xf32>
    %43 = arith.addf %41, %42 : vector<8x128xf32>
    %c0_23 = arith.constant 0 : index
    %c0_24 = arith.constant 0 : index
    %44 = vector.load %arg8[%c0_23, %c0_24] : memref<8x128xf32, #tpu.memory_space<vmem>>, vector<8x128xf32>
    tpu.vector_store %arg8[%c0_23, %c0_24], %43 {strides = array<i32>} : memref<8x128xf32, #tpu.memory_space<vmem>>, vector<8x128xf32>,
    return
  }
  func.func @transform_0(%arg0: i32) -> (i32, i32) {
    %c0_i32 = arith.constant 0 : i32
    %c0_i32_0 = arith.constant 0 : i32
    return %arg0, %c0_i32 : i32, i32
  }
  func.func @transform_1(%arg0: i32) -> (i32, i32) {
    %c0_i32 = arith.constant 0 : i32
    %c0_i32_0 = arith.constant 0 : i32
    %c0_i32_1 = arith.constant 0 : i32
    return %c0_i32, %c0_i32_0 : i32, i32
  }
  func.func @transform_2(%arg0: i32) -> (i32, i32) {
    %c0_i32 = arith.constant 0 : i32
    %c0_i32_0 = arith.constant 0 : i32
    %c0_i32_1 = arith.constant 0 : i32
    return %c0_i32, %c0_i32_0 : i32, i32
  }
  func.func @transform_3(%arg0: i32) -> (i32, i32) {
    %c0_i32 = arith.constant 0 : i32
    %c0_i32_0 = arith.constant 0 : i32
    %c0_i32_1 = arith.constant 0 : i32
    return %c0_i32, %c0_i32_0 : i32, i32
  }
  func.func @transform_4(%arg0: i32) -> (i32, i32) {
    %c0_i32 = arith.constant 0 : i32
    %c0_i32_0 = arith.constant 0 : i32
    %c0_i32_1 = arith.constant 0 : i32
    return %c0_i32, %c0_i32_0 : i32, i32
  }
  func.func @transform_5(%arg0: i32) -> (i32, i32) {
    %c0_i32 = arith.constant 0 : i32
    %c0_i32_0 = arith.constant 0 : i32
    %c0_i32_1 = arith.constant 0 : i32
    return %c0_i32, %c0_i32_0 : i32, i32
  }
  func.func @transform_6(%arg0: i32) -> (i32, i32) {
    %c0_i32 = arith.constant 0 : i32
    %c0_i32_0 = arith.constant 0 : i32
    %c0_i32_1 = arith.constant 0 : i32
    return %c0_i32, %c0_i32_0 : i32, i32
  }
  func.func @transform_7(%arg0: i32) -> (i32, i32) {
    %c0_i32 = arith.constant 0 : i32
    %c0_i32_0 = arith.constant 0 : i32
    return %arg0, %c0_i32 : i32, i32
  }
}

</mosaic_0001>

<llo_original>
// kernel: tpu_custom_call.1
$region0: #{tpu_custom_call.1}
  #allocation0 [shape = 'u32[]', space=smem, size = 0x4, offset = 0x4, fixed_abs, tag = 'smem constant byte address 0x4 - core index']
  #allocation1 [shape = 'u32[144,128]{1,0:T(1,128)}', space=vmem, size = 0x12000, scoped, tag = 'internal scratch']
  %s0 = inlined_call_operand.hbm [shape: f32[16,128], index: 0, kind: input, shape index: {}]
  %s1 = inlined_call_operand.hbm [shape: bf16[128,128], index: 1, kind: input, shape index: {}]
  %s2 = inlined_call_operand.vmem [shape: f32[1,128], index: 2, kind: input, shape index: {}]
  %s3 = inlined_call_operand.hbm [shape: bf16[128,128], index: 3, kind: input, shape index: {}]
  %s4 = inlined_call_operand.vmem [shape: f32[1,128], index: 4, kind: input, shape index: {}]
  %s5 = inlined_call_operand.vmem [shape: f32[1,128], index: 5, kind: input, shape index: {}]
  %s6 = inlined_call_operand.vmem [shape: f32[1,128], index: 6, kind: input, shape index: {}]
  %s7 = inlined_call_operand.hbm [shape: f32[16,128], index: 7, kind: output, shape index: {}]
  %s8 = sld [smem:[#allocation0]]
  $region73: #{tpu_custom_call.1} parent=0
    _
  %s10 = ssub.s32 1, %s8
  %s11 = scalar_select 0, %s10, %s8
  $region1: #{tpu_custom_call.1} parent=0
    #allocation2 [shape = 'u8[8192]{0}', space=vmem, size = 0x2000, scoped, tag = 'input window, operand 0']
    #allocation3 [shape = 's32[2]{0}', space=sflag, size = 0x8, scoped, tag = 'scoped memory for tpu_custom_call.1']
    #allocation4 [shape = 's32[2]{0}', space=sflag, size = 0x8, scoped, tag = 'scoped memory for tpu_custom_call.1']
    #allocation5 [shape = 'u8[32768]{0}', space=vmem, size = 0x8000, scoped, tag = 'input window, operand 1, single buffered']
    #allocation6 [shape = 's32[1]{0}', space=sflag, size = 0x4, scoped, tag = 'scoped memory for tpu_custom_call.1']
    #allocation7 [shape = 'u8[32768]{0}', space=vmem, size = 0x8000, scoped, tag = 'input window, operand 3, single buffered']
    #allocation8 [shape = 'u8[8192]{0}', space=vmem, size = 0x2000, scoped, tag = 'output window, operand 0']
    %12 = vsyncpa [#allocation3], 0
    %s13 = scalar_lea.sflag [#allocation3], 1
    %14 = vsyncpa %s13, 0
    %15 = vsyncpa [#allocation6], 0
    %16 = vsyncpa [#allocation4], 0
    %s17 = scalar_lea.sflag [#allocation4], 1
    %18 = vsyncpa %s17, 0
    loop: start=0, step=1, limit=4
    $region2: #{tpu_custom_call.1} parent=1 // loop_pre_header
      _
    $region3: #{tpu_custom_call.1} parent=1 // loop_header
      %s20 = sphi 0, %s24
      %p21 = scmp.ge.s32.totalorder %s20, 4
      %s30 = sphi 0, %s32
      %s33 = sphi 0, %s30
      %s34 = sphi 0, %s33
      %s50 = sphi 0, %s34
      %s54 = sphi 0, %s54
      %s56 = sphi 0, %s54
      %s57 = sphi 0, %s56
      %s71 = sphi 0, %s57
      %s75 = sphi 0, %s75
      %s77 = sphi 0, %s75
      %s78 = sphi 0, %s77
      %s92 = sphi 0, %s78
      %s96 = sphi 0, %s96
      %s98 = sphi 0, %s96
      %s99 = sphi 0, %s98
      %s113 = sphi 0, %s99
      %s117 = sphi 0, %s117
      %s119 = sphi 0, %s117
      %s120 = sphi 0, %s119
      %s134 = sphi 0, %s120
      %s138 = sphi 0, %s138
      %s140 = sphi 0, %s138
      %s141 = sphi 0, %s140
      %s155 = sphi 0, %s141
      %s159 = sphi 0, %s159
      %s161 = sphi 0, %s159
      %s162 = sphi 0, %s161
      %s176 = sphi 0, %s162
      %s182 = sphi 0, %s184
      %s185 = sphi 0, %s182
      %s186 = sphi 0, %s185
      %s202 = sphi 0, %s186
    $region4: #{tpu_custom_call.1} parent=1 // loop_header_branch
      %23 = sbr.rel (%p21) target = $region8
    $region5: #{tpu_custom_call.1} parent=1 // loop_body
      %s25 = ssub.s32 %s20, 1
      %s26 = ssub.s32 %s20, 2
      %s27 = sadd.s32 %s20, 1
      %s28 = ssub.s32 %s20, %s27
      %p29 = scmp.eq.s32.totalorder %s28, 0
      %s31 = sadd.s32 %s30, 1
      %s32 = scalar_select %p29, %s30, %s31
      %p35 = pneg %p29
      %p36 = scmp.eq.s32.totalorder %s20, 1
      %p37 = por %p35, %p36
      %p38 = scmp.ne.s32.totalorder %s30, %s33
      %p39 = scmp.eq.s32.totalorder %s20, 0
      %p40 = por %p38, %p39
      %p41 = scmp.ne.s32.totalorder %s30, %s33
      %p42 = scmp.eq.s32.totalorder %s25, 1
      %p43 = por %p41, %p42
      %p44 = scmp.ne.s32.totalorder %s33, %s34
      %p45 = scmp.eq.s32.totalorder %s25, 0
      %p46 = por %p44, %p45
      %p47 = scmp.ne.s32.totalorder %s33, %s34
      %p48 = scmp.eq.s32.totalorder %s26, 1
      %p49 = por %p47, %p48
      %p51 = scmp.ne.s32.totalorder %s34, %s50
      %p52 = scmp.eq.s32.totalorder %s26, 0
      %p53 = por %p51, %p52
      %s55 = sadd.s32 %s54, 1
      %p58 = scmp.eq.s32.totalorder %s20, 1
      %p59 = scmp.ne.s32.totalorder %s54, %s56
      %p60 = scmp.eq.s32.totalorder %s20, 0
      %p61 = por %p59, %p60
      %p62 = scmp.ne.s32.totalorder %s54, %s56
      %p63 = scmp.eq.s32.totalorder %s25, 1
      %p64 = por %p62, %p63
      %p65 = scmp.ne.s32.totalorder %s56, %s57
      %p66 = scmp.eq.s32.totalorder %s25, 0
      %p67 = por %p65, %p66
      %p68 = scmp.ne.s32.totalorder %s56, %s57
      %p69 = scmp.eq.s32.totalorder %s26, 1
      %p70 = por %p68, %p69
      %p72 = scmp.ne.s32.totalorder %s57, %s71
      %p73 = scmp.eq.s32.totalorder %s26, 0
      %p74 = por %p72, %p73
      %s76 = sadd.s32 %s75, 1
      %p79 = scmp.eq.s32.totalorder %s20, 1
      %p80 = scmp.ne.s32.totalorder %s75, %s77
      %p81 = scmp.eq.s32.totalorder %s20, 0
      %p82 = por %p80, %p81
      %p83 = scmp.ne.s32.totalorder %s75, %s77
      %p84 = scmp.eq.s32.totalorder %s25, 1
      %p85 = por %p83, %p84
      %p86 = scmp.ne.s32.totalorder %s77, %s78
      %p87 = scmp.eq.s32.totalorder %s25, 0
      %p88 = por %p86, %p87
      %p89 = scmp.ne.s32.totalorder %s77, %s78
      %p90 = scmp.eq.s32.totalorder %s26, 1
      %p91 = por %p89, %p90
      %p93 = scmp.ne.s32.totalorder %s78, %s92
      %p94 = scmp.eq.s32.totalorder %s26, 0
      %p95 = por %p93, %p94
      %s97 = sadd.s32 %s96, 1
      %p100 = scmp.eq.s32.totalorder %s20, 1
      %p101 = scmp.ne.s32.totalorder %s96, %s98
      %p102 = scmp.eq.s32.totalorder %s20, 0
      %p103 = por %p101, %p102
      %p104 = scmp.ne.s32.totalorder %s96, %s98
      %p105 = scmp.eq.s32.totalorder %s25, 1
      %p106 = por %p104, %p105
      %p107 = scmp.ne.s32.totalorder %s98, %s99
      %p108 = scmp.eq.s32.totalorder %s25, 0
      %p109 = por %p107, %p108
      %p110 = scmp.ne.s32.totalorder %s98, %s99
      %p111 = scmp.eq.s32.totalorder %s26, 1
      %p112 = por %p110, %p111
      %p114 = scmp.ne.s32.totalorder %s99, %s113
      %p115 = scmp.eq.s32.totalorder %s26, 0
      %p116 = por %p114, %p115
      %s118 = sadd.s32 %s117, 1
      %p121 = scmp.eq.s32.totalorder %s20, 1
      %p122 = scmp.ne.s32.totalorder %s117, %s119
      %p123 = scmp.eq.s32.totalorder %s20, 0
      %p124 = por %p122, %p123
      %p125 = scmp.ne.s32.totalorder %s117, %s119
      %p126 = scmp.eq.s32.totalorder %s25, 1
      %p127 = por %p125, %p126
      %p128 = scmp.ne.s32.totalorder %s119, %s120
      %p129 = scmp.eq.s32.totalorder %s25, 0
      %p130 = por %p128, %p129
      %p131 = scmp.ne.s32.totalorder %s119, %s120
      %p132 = scmp.eq.s32.totalorder %s26, 1
      %p133 = por %p131, %p132
      %p135 = scmp.ne.s32.totalorder %s120, %s134
      %p136 = scmp.eq.s32.totalorder %s26, 0
      %p137 = por %p135, %p136
      %s139 = sadd.s32 %s138, 1
      %p142 = scmp.eq.s32.totalorder %s20, 1
      %p143 = scmp.ne.s32.totalorder %s138, %s140
      %p144 = scmp.eq.s32.totalorder %s20, 0
      %p145 = por %p143, %p144
      %p146 = scmp.ne.s32.totalorder %s138, %s140
      %p147 = scmp.eq.s32.totalorder %s25, 1
      %p148 = por %p146, %p147
      %p149 = scmp.ne.s32.totalorder %s140, %s141
      %p150 = scmp.eq.s32.totalorder %s25, 0
      %p151 = por %p149, %p150
      %p152 = scmp.ne.s32.totalorder %s140, %s141
      %p153 = scmp.eq.s32.totalorder %s26, 1
      %p154 = por %p152, %p153
      %p156 = scmp.ne.s32.totalorder %s141, %s155
      %p157 = scmp.eq.s32.totalorder %s26, 0
      %p158 = por %p156, %p157
      %s160 = sadd.s32 %s159, 1
      %p163 = scmp.eq.s32.totalorder %s20, 1
      %p164 = scmp.ne.s32.totalorder %s159, %s161
      %p165 = scmp.eq.s32.totalorder %s20, 0
      %p166 = por %p164, %p165
      %p167 = scmp.ne.s32.totalorder %s159, %s161
      %p168 = scmp.eq.s32.totalorder %s25, 1
      %p169 = por %p167, %p168
      %p170 = scmp.ne.s32.totalorder %s161, %s162
      %p171 = scmp.eq.s32.totalorder %s25, 0
      %p172 = por %p170, %p171
      %p173 = scmp.ne.s32.totalorder %s161, %s162
      %p174 = scmp.eq.s32.totalorder %s26, 1
      %p175 = por %p173, %p174
      %p177 = scmp.ne.s32.totalorder %s162, %s176
      %p178 = scmp.eq.s32.totalorder %s26, 0
      %p179 = por %p177, %p178
      %s180 = ssub.s32 %s20, %s27
      %p181 = scmp.eq.s32.totalorder %s180, 0
      %s183 = sadd.s32 %s182, 1
      %s184 = scalar_select %p181, %s182, %s183
      %p187 = pneg %p181
      %p188 = scmp.eq.s32.totalorder %s20, 1
      %p189 = por %p187, %p188
      %p190 = scmp.ne.s32.totalorder %s182, %s185
      %p191 = scmp.eq.s32.totalorder %s20, 0
      %p192 = por %p190, %p191
      %p193 = scmp.ne.s32.totalorder %s182, %s185
      %p194 = scmp.eq.s32.totalorder %s25, 1
      %p195 = por %p193, %p194
      %p196 = scmp.ne.s32.totalorder %s185, %s186
      %p197 = scmp.eq.s32.totalorder %s25, 0
      %p198 = por %p196, %p197
      %p199 = scmp.ne.s32.totalorder %s185, %s186
      %p200 = scmp.eq.s32.totalorder %s26, 1
      %p201 = por %p199, %p200
      %p203 = scmp.ne.s32.totalorder %s186, %s202
      %p204 = scmp.eq.s32.totalorder %s26, 0
      %p205 = por %p203, %p204
      %p206 = scmp.le.s32.totalorder 1, %s20
      %p207 = scmp.lt.s32.totalorder %s20, 3
      %p208 = pnand %p206, %p207
      %p209 = pneg %p208
      // Predicated region
      $region9: #{tpu_custom_call.1} parent=5 // pred_check
        _
      $region10: #{tpu_custom_call.1} parent=5 // pred_check_branch
        %211 = sbr.rel (%p208) target = $region12
      $region11: #{tpu_custom_call.1} parent=5 // pred_region
        %s212 = ssub.s32 %s20, 1
        // Predicated region
        $region13: #{tpu_custom_call.1} parent=11 // pred_check
          %p213 = pneg %p67
        $region14: #{tpu_custom_call.1} parent=11 // pred_check_branch
          %215 = sbr.rel (%p213) target = $region16
        $region15: #{tpu_custom_call.1} parent=11 // pred_region
          %s217 = ssub.s32 1024, 1024
          %218 = vsyncadd [#allocation6], %s217
          %s219 = sshll.u32 [#allocation5], 4
          %s220 = int_to_ptr.vmem [resolvable:$true] %s219
          %225 = dma.hbm_to_vmem [thread:$0]  %s1, 1024, %s220, [#allocation6], 64, 64, 4
        $region16: #{tpu_custom_call.1} parent=11 // pred_fallthru
          _
        // Predicated region
        $region17: #{tpu_custom_call.1} parent=11 // pred_check
          %p226 = pneg %p88
        $region18: #{tpu_custom_call.1} parent=11 // pred_check_branch
          %228 = sbr.rel (%p226) target = $region20
        $region19: #{tpu_custom_call.1} parent=11 // pred_region
          _
        $region20: #{tpu_custom_call.1} parent=11 // pred_fallthru
          _
        // Predicated region
        $region21: #{tpu_custom_call.1} parent=11 // pred_check
          %p229 = pneg %p109
        $region22: #{tpu_custom_call.1} parent=11 // pred_check_branch
          %231 = sbr.rel (%p229) target = $region24
        $region23: #{tpu_custom_call.1} parent=11 // pred_region
          %s233 = ssub.s32 1024, 1024
          %234 = vsyncadd [#allocation6], %s233
          %s235 = sshll.u32 [#allocation7], 4
          %s236 = int_to_ptr.vmem [resolvable:$true] %s235
          %241 = dma.hbm_to_vmem [thread:$0]  %s3, 1024, %s236, [#allocation6], 64, 64, 4
        $region24: #{tpu_custom_call.1} parent=11 // pred_fallthru
          _
        // Predicated region
        $region25: #{tpu_custom_call.1} parent=11 // pred_check
          %p242 = pneg %p130
        $region26: #{tpu_custom_call.1} parent=11 // pred_check_branch
          %244 = sbr.rel (%p242) target = $region28
        $region27: #{tpu_custom_call.1} parent=11 // pred_region
          _
        $region28: #{tpu_custom_call.1} parent=11 // pred_fallthru
          _
        // Predicated region
        $region29: #{tpu_custom_call.1} parent=11 // pred_check
          %p245 = pneg %p151
        $region30: #{tpu_custom_call.1} parent=11 // pred_check_branch
          %247 = sbr.rel (%p245) target = $region32
        $region31: #{tpu_custom_call.1} parent=11 // pred_region
          _
        $region32: #{tpu_custom_call.1} parent=11 // pred_fallthru
          _
        // Predicated region
        $region33: #{tpu_custom_call.1} parent=11 // pred_check
          %p248 = pneg %p172
        $region34: #{tpu_custom_call.1} parent=11 // pred_check_branch
          %250 = sbr.rel (%p248) target = $region36
        $region35: #{tpu_custom_call.1} parent=11 // pred_region
          _
        $region36: #{tpu_custom_call.1} parent=11 // pred_fallthru
          _
      $region12: #{tpu_custom_call.1} parent=5 // pred_fallthru
        _
      %p251 = scmp.lt.s32.totalorder %s20, 2
      // Predicated region
      $region37: #{tpu_custom_call.1} parent=5 // pred_check
        %p252 = pneg %p251
      $region38: #{tpu_custom_call.1} parent=5 // pred_check_branch
        %254 = sbr.rel (%p252) target = $region40
      $region39: #{tpu_custom_call.1} parent=5 // pred_region
        // Predicated region
        $region41: #{tpu_custom_call.1} parent=39 // pred_check
          %p255 = pneg %p40
        $region42: #{tpu_custom_call.1} parent=39 // pred_check_branch
          %257 = sbr.rel (%p255) target = $region44
        $region43: #{tpu_custom_call.1} parent=39 // pred_region
          %s258 = sand.u32 %s30, 1
          %s259 = scalar_lea.sflag [#allocation3], %s258
          %s260 = sand.u32 %s30, 1
          %s261 = smul.addr %s260, 8
          %s262 = scalar_lea.vmem [#allocation2], %s261
          %s264 = ssub.s32 128, 128
          %265 = vsyncadd %s259, %s264
          %s266 = smul.addr %s20, 128
          %s267 = scalar_lea.hbm %s0, %s266
          %s269 = sshll.u32 %s262, 4
          %s270 = int_to_ptr.vmem [resolvable:$true] %s269
          %272 = dma.hbm_to_vmem [thread:$0]  %s267, 128, %s270, %s259
        $region44: #{tpu_custom_call.1} parent=39 // pred_fallthru
          _
      $region40: #{tpu_custom_call.1} parent=5 // pred_fallthru
        _
      %p273 = scmp.le.s32.totalorder 1, %s20
      %p274 = scmp.lt.s32.totalorder %s20, 3
      %p275 = pnand %p273, %p274
      %p276 = pneg %p275
      // Predicated region
      $region45: #{tpu_custom_call.1} parent=5 // pred_check
        _
      $region46: #{tpu_custom_call.1} parent=5 // pred_check_branch
        %278 = sbr.rel (%p275) target = $region48
      $region47: #{tpu_custom_call.1} parent=5 // pred_region
        %s279 = ssub.s32 %s20, 1
        %s280 = sand.u32 %s33, 1
        %s281 = scalar_lea.sflag [#allocation3], %s280
        %s282 = sand.u32 %s33, 1
        %s283 = smul.addr %s282, 8
        %s284 = scalar_lea.vmem [#allocation2], %s283
        // Predicated region
        $region49: #{tpu_custom_call.1} parent=47 // pred_check
          %p285 = pneg %p46
        $region50: #{tpu_custom_call.1} parent=47 // pred_check_branch
          %287 = sbr.rel (%p285) target = $region52
        $region51: #{tpu_custom_call.1} parent=47 // pred_region
          %288 = dma.done %s281, 128
        $region52: #{tpu_custom_call.1} parent=47 // pred_fallthru
          _
        // Predicated region
        $region53: #{tpu_custom_call.1} parent=47 // pred_check
          %p289 = pneg %p67
        $region54: #{tpu_custom_call.1} parent=47 // pred_check_branch
          %291 = sbr.rel (%p289) target = $region56
        $region55: #{tpu_custom_call.1} parent=47 // pred_region
          %292 = dma.done [#allocation6], 1024
        $region56: #{tpu_custom_call.1} parent=47 // pred_fallthru
          _
        // Predicated region
        $region57: #{tpu_custom_call.1} parent=47 // pred_check
          %p293 = pneg %p109
        $region58: #{tpu_custom_call.1} parent=47 // pred_check_branch
          %295 = sbr.rel (%p293) target = $region60
        $region59: #{tpu_custom_call.1} parent=47 // pred_region
          %296 = dma.done [#allocation6], 1024
        $region60: #{tpu_custom_call.1} parent=47 // pred_fallthru
          _
        %s297 = sand.u32 %s33, 1
        %s298 = scalar_lea.sflag [#allocation3], %s297
        %s299 = sand.u32 %s33, 1
        %s300 = smul.addr %s299, 8
        %s301 = scalar_lea.vmem [#allocation2], %s300
        %p302 = pneg %p46
        %p303 = pneg %p43
        %p304 = pneg %p67
        %p305 = pneg %p64
        %p306 = pneg %p88
        %p307 = pneg %p85
        %p308 = pneg %p109
        %p309 = pneg %p106
        %p310 = pneg %p130
        %p311 = pneg %p127
        %p312 = pneg %p151
        %p313 = pneg %p148
        %p314 = pneg %p172
        %p315 = pneg %p169
        %p316 = pneg %p198
        %p317 = pneg %p195
        %s318 = sand.u32 %s185, 1
        %s319 = scalar_lea.sflag [#allocation4], %s318
        %s320 = sand.u32 %s185, 1
        %s321 = smul.addr %s320, 8
        %s322 = scalar_lea.vmem [#allocation8], %s321
        %v324 = vld [vmem:[%s284] sm:$0xff]
        %v325 = vpack.c.bf16 %v324, %v324
        %v326 = vld [vmem:[#allocation5] sm:$0xf]
        %v327 = vld [vmem:[#allocation5 + $0x4] sm:$0xf]
        %v328 = vld [vmem:[#allocation5 + $0x8] sm:$0xf]
        %v329 = vld [vmem:[#allocation5 + $0xc] sm:$0xf]
        %v330 = vld [vmem:[#allocation5 + $0x10] sm:$0xf]
        %v331 = vld [vmem:[#allocation5 + $0x14] sm:$0xf]
        %v332 = vld [vmem:[#allocation5 + $0x18] sm:$0xf]
        %v333 = vld [vmem:[#allocation5 + $0x1c] sm:$0xf]
        %v334 = vld [vmem:[#allocation5 + $0x20] sm:$0xf]
        %v335 = vld [vmem:[#allocation5 + $0x24] sm:$0xf]
        %v336 = vld [vmem:[#allocation5 + $0x28] sm:$0xf]
        %v337 = vld [vmem:[#allocation5 + $0x2c] sm:$0xf]
        %v338 = vld [vmem:[#allocation5 + $0x30] sm:$0xf]
        %v339 = vld [vmem:[#allocation5 + $0x34] sm:$0xf]
        %v340 = vld [vmem:[#allocation5 + $0x38] sm:$0xf]
        %v341 = vld [vmem:[#allocation5 + $0x3c] sm:$0xf]
        %v342 = vld [vmem:[%s2] sm:$0x1]
        %v344 = vlaneseq
        %v345 = vshrl.u32 %v344, 7
        %v346 = vsub.s32 0, %v345
        %v347 = vrot.slane %v342, %v346
        %v365 = vunpack.c.l.b16 %v326
        %v366 = vunpack.c.l.b16 %v327
        %v367 = vunpack.c.l.b16 %v328
        %v368 = vunpack.c.l.b16 %v329
        %v369 = vunpack.c.l.b16 %v330
        %v370 = vunpack.c.l.b16 %v331
        %v371 = vunpack.c.l.b16 %v332
        %v372 = vunpack.c.l.b16 %v333
        %v373 = vunpack.c.l.b16 %v334
        %v374 = vunpack.c.l.b16 %v335
        %v375 = vunpack.c.l.b16 %v336
        %v376 = vunpack.c.l.b16 %v337
        %v377 = vunpack.c.l.b16 %v338
        %v378 = vunpack.c.l.b16 %v339
        %v379 = vunpack.c.l.b16 %v340
        %v380 = vunpack.c.l.b16 %v341
        %v381 = vpack.c.b16 %v366, %v365
        %v382 = vpack.c.b16 %v368, %v367
        %v383 = vpack.c.b16 %v370, %v369
        %v384 = vpack.c.b16 %v372, %v371
        %v385 = vpack.c.b16 %v374, %v373
        %v386 = vpack.c.b16 %v376, %v375
        %v387 = vpack.c.b16 %v378, %v377
        %v388 = vpack.c.b16 %v380, %v379
        %397 = vmatprep.subr.bf16.mxu0 0
        %398 = vmatpush1.bf16.msra.mxu0 %v381
        %399 = vmatprep.subr.bf16.mxu0 0
        %400 = vmatpush1.bf16.msra.mxu0 %v382
        %401 = vmatprep.subr.bf16.mxu0 0
        %402 = vmatpush1.bf16.msra.mxu0 %v383
        %403 = vmatprep.subr.bf16.mxu0 0
        %404 = vmatpush1.bf16.msra.mxu0 %v384
        %405 = vmatprep.subr.bf16.mxu0 0
        %406 = vmatpush1.bf16.msra.mxu0 %v385
        %407 = vmatprep.subr.bf16.mxu0 0
        %408 = vmatpush1.bf16.msra.mxu0 %v386
        %409 = vmatprep.subr.bf16.mxu0 0
        %410 = vmatpush1.bf16.msra.mxu0 %v387
        %411 = vmatprep.subr.bf16.mxu0 0
        %412 = vmatpush1.bf16.msra.mxu0 %v388
        %413 = vmatprep.subr.bf16.mxu0 0
        %414 = vmatpush1.bf16.msra.mxu0 0
        %415 = vmatprep.subr.bf16.mxu0 0
        %416 = vmatpush1.bf16.msra.mxu0 0
        %417 = vmatprep.subr.bf16.mxu0 0
        %418 = vmatpush1.bf16.msra.mxu0 0
        %419 = vmatprep.subr.bf16.mxu0 0
        %420 = vmatpush1.bf16.msra.mxu0 0
        %421 = vmatprep.subr.bf16.mxu0 0
        %422 = vmatpush1.bf16.msra.mxu0 0
        %423 = vmatprep.subr.bf16.mxu0 0
        %424 = vmatpush1.bf16.msra.mxu0 0
        %425 = vmatprep.subr.bf16.mxu0 0
        %426 = vmatpush1.bf16.msra.mxu0 0
        %427 = vmatprep.subr.bf16.mxu0 0
        %428 = vmatpush1.bf16.msra.mxu0 0
        %429 = vmatprep.mubr.bf16.mxu0 0
        %430 = vmatmul.mubr.bf16.gmra.mrb[0].mxu0 %v325
        %v431 = vpop.f32.mrb[0].mxu0
        %v432 = vadd.f32 %v347, %v431
        %v433 = vpop.f32.mrb[0].mxu0
        %v434 = vpop.f32.mrb[0].mxu0
        %v435 = vpop.f32.mrb[0].mxu0
        %436 = vdwg.mxu0
        %v437 = vmax.f32 %v432, 0.0
        %v438 = vpack.c.bf16 %v437, %v437
        %v439 = vld [vmem:[#allocation7] sm:$0xf]
        %v440 = vld [vmem:[#allocation7 + $0x4] sm:$0xf]
        %v441 = vld [vmem:[#allocation7 + $0x8] sm:$0xf]
        %v442 = vld [vmem:[#allocation7 + $0xc] sm:$0xf]
        %v443 = vld [vmem:[#allocation7 + $0x10] sm:$0xf]
        %v444 = vld [vmem:[#allocation7 + $0x14] sm:$0xf]
        %v445 = vld [vmem:[#allocation7 + $0x18] sm:$0xf]
        %v446 = vld [vmem:[#allocation7 + $0x1c] sm:$0xf]
        %v447 = vld [vmem:[#allocation7 + $0x20] sm:$0xf]
        %v448 = vld [vmem:[#allocation7 + $0x24] sm:$0xf]
        %v449 = vld [vmem:[#allocation7 + $0x28] sm:$0xf]
        %v450 = vld [vmem:[#allocation7 + $0x2c] sm:$0xf]
        %v451 = vld [vmem:[#allocation7 + $0x30] sm:$0xf]
        %v452 = vld [vmem:[#allocation7 + $0x34] sm:$0xf]
        %v453 = vld [vmem:[#allocation7 + $0x38] sm:$0xf]
        %v454 = vld [vmem:[#allocation7 + $0x3c] sm:$0xf]
        %v471 = vunpack.c.l.b16 %v439
        %v472 = vunpack.c.l.b16 %v440
        %v473 = vunpack.c.l.b16 %v441
        %v474 = vunpack.c.l.b16 %v442
        %v475 = vunpack.c.l.b16 %v443
        %v476 = vunpack.c.l.b16 %v444
        %v477 = vunpack.c.l.b16 %v445
        %v478 = vunpack.c.l.b16 %v446
        %v479 = vunpack.c.l.b16 %v447
        %v480 = vunpack.c.l.b16 %v448
        %v481 = vunpack.c.l.b16 %v449
        %v482 = vunpack.c.l.b16 %v450
        %v483 = vunpack.c.l.b16 %v451
        %v484 = vunpack.c.l.b16 %v452
        %v485 = vunpack.c.l.b16 %v453
        %v486 = vunpack.c.l.b16 %v454
        %v487 = vpack.c.b16 %v472, %v471
        %v488 = vpack.c.b16 %v474, %v473
        %v489 = vpack.c.b16 %v476, %v475
        %v490 = vpack.c.b16 %v478, %v477
        %v491 = vpack.c.b16 %v480, %v479
        %v492 = vpack.c.b16 %v482, %v481
        %v493 = vpack.c.b16 %v484, %v483
        %v494 = vpack.c.b16 %v486, %v485
        %503 = vmatprep.subr.bf16.mxu0 0
        %504 = vmatpush1.bf16.msra.mxu0 %v487
        %505 = vmatprep.subr.bf16.mxu0 0
        %506 = vmatpush1.bf16.msra.mxu0 %v488
        %507 = vmatprep.subr.bf16.mxu0 0
        %508 = vmatpush1.bf16.msra.mxu0 %v489
        %509 = vmatprep.subr.bf16.mxu0 0
        %510 = vmatpush1.bf16.msra.mxu0 %v490
        %511 = vmatprep.subr.bf16.mxu0 0
        %512 = vmatpush1.bf16.msra.mxu0 %v491
        %513 = vmatprep.subr.bf16.mxu0 0
        %514 = vmatpush1.bf16.msra.mxu0 %v492
        %515 = vmatprep.subr.bf16.mxu0 0
        %516 = vmatpush1.bf16.msra.mxu0 %v493
        %517 = vmatprep.subr.bf16.mxu0 0
        %518 = vmatpush1.bf16.msra.mxu0 %v494
        %519 = vmatprep.subr.bf16.mxu0 0
        %520 = vmatpush1.bf16.msra.mxu0 0
        %521 = vmatprep.subr.bf16.mxu0 0
        %522 = vmatpush1.bf16.msra.mxu0 0
        %523 = vmatprep.subr.bf16.mxu0 0
        %524 = vmatpush1.bf16.msra.mxu0 0
        %525 = vmatprep.subr.bf16.mxu0 0
        %526 = vmatpush1.bf16.msra.mxu0 0
        %527 = vmatprep.subr.bf16.mxu0 0
        %528 = vmatpush1.bf16.msra.mxu0 0
        %529 = vmatprep.subr.bf16.mxu0 0
        %530 = vmatpush1.bf16.msra.mxu0 0
        %531 = vmatprep.subr.bf16.mxu0 0
        %532 = vmatpush1.bf16.msra.mxu0 0
        %533 = vmatprep.subr.bf16.mxu0 0
        %534 = vmatpush1.bf16.msra.mxu0 0
        %535 = vmatprep.mubr.bf16.mxu0 0
        %536 = vmatmul.mubr.bf16.gmra.mrb[0].mxu0 %v438
        %v537 = vpop.f32.mrb[0].mxu0
        %v538 = vadd.f32 0.0, %v537
        %v539 = vpop.f32.mrb[0].mxu0
        %v540 = vpop.f32.mrb[0].mxu0
        %v541 = vpop.f32.mrb[0].mxu0
        %542 = vdwg.mxu0
        %v543 = vadd.f32 %v324, %v538
        %v544 = vld [vmem:[%s4] sm:$0x1]
        %v546 = vlaneseq
        %v547 = vshrl.u32 %v546, 7
        %v548 = vsub.s32 0, %v547
        %v549 = vrot.slane %v544, %v548
        %v551 = vadd.f32 %v543, %v549
        %v552 = vld [vmem:[%s5] sm:$0x1]
        %v553 = vld [vmem:[%s6] sm:$0x1]
        %554 = vadd.xlane.f32.xlu0 %v551
        %v555 = vpop.xlane.xlu0 %554
        %v556 = vmul.f32 %v555, 0.03125
        %v557 = vsub.f32 %v551, %v556
        %v558 = vlaneseq
        %v559 = vand.u32 %v558, 127
        %vm560 = vcmp.lt.s32.totalorder %v559, 32
        %v561 = vsel %vm560, %v557, 0.0
        %v562 = vmul.f32 %v561, %v561
        %563 = vadd.xlane.f32.xlu0 %v562
        %v564 = vpop.xlane.xlu0 %563
        %v565 = vmul.f32 %v564, 0.03125
        %v566 = vadd.f32 %v565, 1e-05
        %v567 = vrsqrt.pop %v566
        %v568 = vmul.f32 %v561, %v567
        %v570 = vlaneseq
        %v571 = vshrl.u32 %v570, 7
        %v572 = vsub.s32 0, %v571
        %v573 = vrot.slane %v552, %v572
        %v575 = vmul.f32 %v568, %v573
        %v577 = vlaneseq
        %v578 = vshrl.u32 %v577, 7
        %v579 = vsub.s32 0, %v578
        %v580 = vrot.slane %v553, %v579
        %v582 = vadd.f32 %v575, %v580
        %583 = vst [vmem:[%s322] sm:$0xff] %v582
        %s584 = sand.u32 %s185, 1
        %s585 = scalar_lea.sflag [#allocation4], %s584
        %s586 = sand.u32 %s185, 1
        %s587 = smul.addr %s586, 8
        %s588 = scalar_lea.vmem [#allocation8], %s587
        // Predicated region
        $region61: #{tpu_custom_call.1} parent=47 // pred_check
          %p589 = pneg %p195
        $region62: #{tpu_custom_call.1} parent=47 // pred_check_branch
          %591 = sbr.rel (%p589) target = $region64
        $region63: #{tpu_custom_call.1} parent=47 // pred_region
          %s593 = ssub.s32 128, 128
          %594 = vsyncadd %s585, %s593
          %s595 = smul.addr %s25, 128
          %s596 = scalar_lea.hbm %s7, %s595
          %s598 = sshll.u32 %s588, 4
          %s599 = int_to_ptr.vmem [resolvable:$true] %s598
          %601 = dma.vmem_to_hbm [thread:$0]  %s599, 128, %s596, %s585
        $region64: #{tpu_custom_call.1} parent=47 // pred_fallthru
          _
      $region48: #{tpu_custom_call.1} parent=5 // pred_fallthru
        _
      %p602 = scmp.le.s32.totalorder 2, %s20
      // Predicated region
      $region65: #{tpu_custom_call.1} parent=5 // pred_check
        %p603 = pneg %p602
      $region66: #{tpu_custom_call.1} parent=5 // pred_check_branch
        %605 = sbr.rel (%p603) target = $region68
      $region67: #{tpu_custom_call.1} parent=5 // pred_region
        %s606 = ssub.s32 %s20, 2
        // Predicated region
        $region69: #{tpu_custom_call.1} parent=67 // pred_check
          %p607 = pneg %p201
        $region70: #{tpu_custom_call.1} parent=67 // pred_check_branch
          %609 = sbr.rel (%p607) target = $region72
        $region71: #{tpu_custom_call.1} parent=67 // pred_region
          %s610 = sand.u32 %s186, 1
          %s611 = scalar_lea.sflag [#allocation4], %s610
          %s612 = sand.u32 %s186, 1
          %s613 = smul.addr %s612, 8
          %s614 = scalar_lea.vmem [#allocation8], %s613
          %615 = dma.done %s611, 128
        $region72: #{tpu_custom_call.1} parent=67 // pred_fallthru
          _
      $region68: #{tpu_custom_call.1} parent=5 // pred_fallthru
        _
    $region6: #{tpu_custom_call.1} parent=1 // loop_footer
      %s24 = sadd.s32 1, %s20
    $region7: #{tpu_custom_call.1} parent=1 // loop_footer_branch
      %19 = sbr.rel target = $region3
    $region8: #{tpu_custom_call.1} parent=1 // loop_exit
      _
    %616 = vsyncpa [#allocation3], 1
    %s617 = scalar_lea.sflag [#allocation3], 1
    %618 = vsyncpa %s617, 1
    %619 = vsyncpa [#allocation6], 1
    %620 = vsyncpa [#allocation4], 1
    %s621 = scalar_lea.sflag [#allocation4], 1
    %622 = vsyncpa %s621, 1

</llo_original>
